<compile_context>
chip_gen: v7x
topology: tpu7x:2x2x1
jax: 0.10.0
libtpu: 0.0.40
codegen_flags: <defaults>
</compile_context>

<pallas_src>
import jax
import jax.numpy as jnp
from jax.experimental import pallas as pl
from jax.experimental.pallas import tpu as pltpu

IN_F = 4      # fc1 in_features
HID = 6       # fc1 out_features / fc2 in_features
OUT_F = 1     # fc2 out_features

LANES = 512           # lane extent of a tile row (multiple of 128 -> unmasked vst)
ROWS_PER_STEP = 1024  # sublane rows per grid step (multiple of 8). One step moves
                      # ~512K batch elems (~20 MiB double-buffered) -- v6e/v7x
                      # target; needs the raised vmem_limit_bytes below on v5e.

# Packed-parameter layout (single 1-D SMEM vector, 37 floats).
OFF_W1 = 0                     # 0.5*w1, row-major (IN_F, HID): idx = k*HID + j
OFF_B1 = IN_F * HID            # 0.5*b1                    (HID,)
OFF_W2 = OFF_B1 + HID          # 0.25*w2                   (HID,)
OFF_B2 = OFF_W2 + HID          # 0.5*b2 + 0.25*sum(w2)     (1,)
N_PARAMS = OFF_B2 + 1          # 37


def mlp_kernel(x_ref, p_ref, o_ref):
    # x_ref: (IN_F, R, LANES) f32 in VMEM -- x_ref[k] is a dense (R, LANES) tile.
    # p_ref: (37,) f32 in SMEM, resident across all grid steps; scalar reads
    # broadcast against the vector tiles on the VPU (no MXU pass at K=4/6).
    # Sigmoids are pre-folded to plain tanh -> one EUP push each; the final
    # 0.5*t + 0.5 costs 2 VPU ops per tile.
    xs = [x_ref[k] for k in range(IN_F)]                    # 4 dense (R, LANES) tiles
    z = jnp.zeros(o_ref.shape, jnp.float32) + p_ref[OFF_B2]
    for j in range(HID):                                    # static unroll: 6 hidden units
        h = xs[0] * p_ref[OFF_W1 + j] + p_ref[OFF_B1 + j]
        for k in range(1, IN_F):
            h = h + xs[k] * p_ref[OFF_W1 + k * HID + j]
        z = z + jnp.tanh(h) * p_ref[OFF_W2 + j]             # tanh -> EUP slot
    o_ref[...] = 0.5 * jnp.tanh(z) + 0.5


def fold_params(w1, b1, w2, b2):
    # sigmoid(x) = 0.5*tanh(0.5*x) + 0.5.  Fold every 0.5 into the (tiny)
    # parameters so the kernel pays exactly one EUP op per sigmoid:
    #   h'_j = 0.5*b1_j + sum_k (0.5*w1_kj) x_k
    #   y    = 0.5*tanh( (0.5*b2 + 0.25*sum_j w2_j) + sum_j (0.25*w2_j) tanh(h'_j) ) + 0.5
    w1 = jnp.asarray(w1, jnp.float32).reshape(IN_F, HID)
    b1 = jnp.asarray(b1, jnp.float32).reshape(HID)
    w2 = jnp.asarray(w2, jnp.float32).reshape(HID)
    b2 = jnp.asarray(b2, jnp.float32).reshape(())
    return jnp.concatenate([
        (0.5 * w1).reshape(-1),
        0.5 * b1,
        0.25 * w2,
        (0.5 * b2 + 0.25 * jnp.sum(w2)).reshape(1),
    ])


def my_network_forward(x, w1, b1, w2, b2):
    # NOTE: if this MLP is embedded in a larger model, fuse it into the
    # surrounding kernel instead of paying a standalone pallas_call dispatch.
    B = x.shape[0]
    params = fold_params(w1, b1, w2, b2)

    n_rows = pl.cdiv(B, LANES)
    b_pad = n_rows * LANES

    # Pad batch to a multiple of LANES (only when needed) and go feature-major.
    # Pad + transpose fuse into a single XLA copy; the trailing reshape is free.
    xp = x.astype(jnp.float32)
    if b_pad != B:
        xp = jnp.pad(xp, ((0, b_pad - B), (0, 0)))
    xt = xp.T.reshape(IN_F, n_rows, LANES)

    # Row block: full extent if small (allowed: equals the array dim), else
    # ROWS_PER_STEP (multiple of 8).  Last partial block is handled by Pallas.
    r_blk = n_rows if n_rows <= ROWS_PER_STEP else ROWS_PER_STEP
    grid = (pl.cdiv(n_rows, r_blk),)

    out2d = pl.pallas_call(
        mlp_kernel,
        out_shape=jax.ShapeDtypeStruct((n_rows, LANES), jnp.float32),
        grid=grid,
        in_specs=[
            pl.BlockSpec((IN_F, r_blk, LANES), lambda i: (0, i, 0)),   # streamed + double-buffered
            pl.BlockSpec(memory_space=pltpu.MemorySpace.SMEM),         # packed params, resident
        ],
        out_specs=pl.BlockSpec((r_blk, LANES), lambda i: (i, 0)),      # lane-dense 512-wide stores
        compiler_params=pltpu.CompilerParams(
            dimension_semantics=("parallel",),      # shard batch grid across both TCs on v7x
            vmem_limit_bytes=48 * 1024 * 1024,      # ~20 MiB live; covers v5e's 16 MiB default
        ),
    )(xt, params)

    # (n_rows, LANES) -> (B, 1).  The reshape is free; the slice only copies
    # (output-sized, small) when B was padded.
    return out2d.reshape(b_pad)[:B].reshape(B, OUT_F)


def init_params(key):
    # Mirrors nn.Linear default init (uniform +/- 1/sqrt(fan_in)), deterministic.
    k1, k2, k3, k4 = jax.random.split(key, 4)
    bound1 = 1.0 / jnp.sqrt(4.0)
    w1 = jax.random.uniform(k1, (IN_F, HID), jnp.float32, -bound1, bound1)
    b1 = jax.random.uniform(k2, (HID,), jnp.float32, -bound1, bound1)
    bound2 = 1.0 / jnp.sqrt(6.0)
    w2 = jax.random.uniform(k3, (HID,), jnp.float32, -bound2, bound2)
    b2 = jax.random.uniform(k4, (OUT_F,), jnp.float32, -bound2, bound2)
    return w1, b1, w2, b2


if __name__ == "__main__":
    key = jax.random.PRNGKey(0)
    kx, kp = jax.random.split(key)
    B = 8
    x = jax.random.normal(kx, (B, IN_F), dtype=jnp.float32)
    w1, b1, w2, b2 = init_params(kp)

    out = my_network_forward(x, w1, b1, w2, b2)
    out = jax.block_until_ready(out)

    # Reference check in plain JAX
    ref = jax.nn.sigmoid(jax.nn.sigmoid(x @ w1 + b1) @ w2.reshape(HID, OUT_F) + b2)
    assert out.shape == (B, OUT_F)
    assert jnp.allclose(out, ref, atol=1e-5, rtol=1e-5)

    print("KERNEL_OK")
</pallas_src>

<mosaic_0001>
module attributes {stable_mosaic.version = 11 : i64} {
  func.func @mlp_kernel(%arg0: i32, %arg1: memref<4x1x512xf32, #tpu.memory_space<vmem>>, %arg2: memref<37xf32, #tpu.memory_space<smem>>, %arg3: memref<1x512xf32, #tpu.memory_space<vmem>>) attributes {dimension_semantics = [#tpu.dimension_semantics<parallel>], iteration_bounds = array<i64: 1>, scalar_prefetch = 0 : i64, scratch_operands = 0 : i64, tpu.core_type = #tpu.core_type<tc>, window_params = [{transform_indices = @transform_0, window_bounds = array<i64: 4, 1, 512>}, {transform_indices = @transform_1, window_bounds = array<i64: 37>}, {transform_indices = @transform_2, window_bounds = array<i64: 1, 512>}]} {
    %c0 = arith.constant 0 : index
    %c0_0 = arith.constant 0 : index
    %c0_1 = arith.constant 0 : index
    %0 = vector.load %arg1[%c0, %c0_0, %c0_1] : memref<4x1x512xf32, #tpu.memory_space<vmem>>, vector<1x1x512xf32>
    %1 = vector.shape_cast %0 : vector<1x1x512xf32> to vector<1x512xf32>
    %c1 = arith.constant 1 : index
    %c0_2 = arith.constant 0 : index
    %c0_3 = arith.constant 0 : index
    %2 = vector.load %arg1[%c1, %c0_2, %c0_3] : memref<4x1x512xf32, #tpu.memory_space<vmem>>, vector<1x1x512xf32>
    %3 = vector.shape_cast %2 : vector<1x1x512xf32> to vector<1x512xf32>
    %c2 = arith.constant 2 : index
    %c0_4 = arith.constant 0 : index
    %c0_5 = arith.constant 0 : index
    %4 = vector.load %arg1[%c2, %c0_4, %c0_5] : memref<4x1x512xf32, #tpu.memory_space<vmem>>, vector<1x1x512xf32>
    %5 = vector.shape_cast %4 : vector<1x1x512xf32> to vector<1x512xf32>
    %c3 = arith.constant 3 : index
    %c0_6 = arith.constant 0 : index
    %c0_7 = arith.constant 0 : index
    %6 = vector.load %arg1[%c3, %c0_6, %c0_7] : memref<4x1x512xf32, #tpu.memory_space<vmem>>, vector<1x1x512xf32>
    %7 = vector.shape_cast %6 : vector<1x1x512xf32> to vector<1x512xf32>
    %cst = arith.constant 0.000000e+00 : f32
    %8 = vector.broadcast %cst : f32 to vector<1x512xf32>
    %c36 = arith.constant 36 : index
    %9 = memref.load %arg2[%c36] : memref<37xf32, #tpu.memory_space<smem>>
    %10 = vector.broadcast %9 : f32 to vector<1x512xf32>
    %11 = arith.addf %8, %10 : vector<1x512xf32>
    %c0_8 = arith.constant 0 : index
    %12 = memref.load %arg2[%c0_8] : memref<37xf32, #tpu.memory_space<smem>>
    %13 = vector.broadcast %12 : f32 to vector<1x512xf32>
    %14 = arith.mulf %1, %13 : vector<1x512xf32>
    %c24 = arith.constant 24 : index
    %15 = memref.load %arg2[%c24] : memref<37xf32, #tpu.memory_space<smem>>
    %16 = vector.broadcast %15 : f32 to vector<1x512xf32>
    %17 = arith.addf %14, %16 : vector<1x512xf32>
    %c6 = arith.constant 6 : index
    %18 = memref.load %arg2[%c6] : memref<37xf32, #tpu.memory_space<smem>>
    %19 = vector.broadcast %18 : f32 to vector<1x512xf32>
    %20 = arith.mulf %3, %19 : vector<1x512xf32>
    %21 = arith.addf %17, %20 : vector<1x512xf32>
    %c12 = arith.constant 12 : index
    %22 = memref.load %arg2[%c12] : memref<37xf32, #tpu.memory_space<smem>>
    %23 = vector.broadcast %22 : f32 to vector<1x512xf32>
    %24 = arith.mulf %5, %23 : vector<1x512xf32>
    %25 = arith.addf %21, %24 : vector<1x512xf32>
    %c18 = arith.constant 18 : index
    %26 = memref.load %arg2[%c18] : memref<37xf32, #tpu.memory_space<smem>>
    %27 = vector.broadcast %26 : f32 to vector<1x512xf32>
    %28 = arith.mulf %7, %27 : vector<1x512xf32>
    %29 = arith.addf %25, %28 : vector<1x512xf32>
    %30 = math.tanh %29 : vector<1x512xf32>
    %c30 = arith.constant 30 : index
    %31 = memref.load %arg2[%c30] : memref<37xf32, #tpu.memory_space<smem>>
    %32 = vector.broadcast %31 : f32 to vector<1x512xf32>
    %33 = arith.mulf %30, %32 : vector<1x512xf32>
    %34 = arith.addf %11, %33 : vector<1x512xf32>
    %c1_9 = arith.constant 1 : index
    %35 = memref.load %arg2[%c1_9] : memref<37xf32, #tpu.memory_space<smem>>
    %36 = vector.broadcast %35 : f32 to vector<1x512xf32>
    %37 = arith.mulf %1, %36 : vector<1x512xf32>
    %c25 = arith.constant 25 : index
    %38 = memref.load %arg2[%c25] : memref<37xf32, #tpu.memory_space<smem>>
    %39 = vector.broadcast %38 : f32 to vector<1x512xf32>
    %40 = arith.addf %37, %39 : vector<1x512xf32>
    %c7 = arith.constant 7 : index
    %41 = memref.load %arg2[%c7] : memref<37xf32, #tpu.memory_space<smem>>
    %42 = vector.broadcast %41 : f32 to vector<1x512xf32>
    %43 = arith.mulf %3, %42 : vector<1x512xf32>
    %44 = arith.addf %40, %43 : vector<1x512xf32>
    %c13 = arith.constant 13 : index
    %45 = memref.load %arg2[%c13] : memref<37xf32, #tpu.memory_space<smem>>
    %46 = vector.broadcast %45 : f32 to vector<1x512xf32>
    %47 = arith.mulf %5, %46 : vector<1x512xf32>
    %48 = arith.addf %44, %47 : vector<1x512xf32>
    %c19 = arith.constant 19 : index
    %49 = memref.load %arg2[%c19] : memref<37xf32, #tpu.memory_space<smem>>
    %50 = vector.broadcast %49 : f32 to vector<1x512xf32>
    %51 = arith.mulf %7, %50 : vector<1x512xf32>
    %52 = arith.addf %48, %51 : vector<1x512xf32>
    %53 = math.tanh %52 : vector<1x512xf32>
    %c31 = arith.constant 31 : index
    %54 = memref.load %arg2[%c31] : memref<37xf32, #tpu.memory_space<smem>>
    %55 = vector.broadcast %54 : f32 to vector<1x512xf32>
    %56 = arith.mulf %53, %55 : vector<1x512xf32>
    %57 = arith.addf %34, %56 : vector<1x512xf32>
    %c2_10 = arith.constant 2 : index
    %58 = memref.load %arg2[%c2_10] : memref<37xf32, #tpu.memory_space<smem>>
    %59 = vector.broadcast %58 : f32 to vector<1x512xf32>
    %60 = arith.mulf %1, %59 : vector<1x512xf32>
    %c26 = arith.constant 26 : index
    %61 = memref.load %arg2[%c26] : memref<37xf32, #tpu.memory_space<smem>>
    %62 = vector.broadcast %61 : f32 to vector<1x512xf32>
    %63 = arith.addf %60, %62 : vector<1x512xf32>
    %c8 = arith.constant 8 : index
    %64 = memref.load %arg2[%c8] : memref<37xf32, #tpu.memory_space<smem>>
    %65 = vector.broadcast %64 : f32 to vector<1x512xf32>
    %66 = arith.mulf %3, %65 : vector<1x512xf32>
    %67 = arith.addf %63, %66 : vector<1x512xf32>
    %c14 = arith.constant 14 : index
    %68 = memref.load %arg2[%c14] : memref<37xf32, #tpu.memory_space<smem>>
    %69 = vector.broadcast %68 : f32 to vector<1x512xf32>
    %70 = arith.mulf %5, %69 : vector<1x512xf32>
    %71 = arith.addf %67, %70 : vector<1x512xf32>
    %c20 = arith.constant 20 : index
    %72 = memref.load %arg2[%c20] : memref<37xf32, #tpu.memory_space<smem>>
    %73 = vector.broadcast %72 : f32 to vector<1x512xf32>
    %74 = arith.mulf %7, %73 : vector<1x512xf32>
    %75 = arith.addf %71, %74 : vector<1x512xf32>
    %76 = math.tanh %75 : vector<1x512xf32>
    %c32 = arith.constant 32 : index
    %77 = memref.load %arg2[%c32] : memref<37xf32, #tpu.memory_space<smem>>
    %78 = vector.broadcast %77 : f32 to vector<1x512xf32>
    %79 = arith.mulf %76, %78 : vector<1x512xf32>
    %80 = arith.addf %57, %79 : vector<1x512xf32>
    %c3_11 = arith.constant 3 : index
    %81 = memref.load %arg2[%c3_11] : memref<37xf32, #tpu.memory_space<smem>>
    %82 = vector.broadcast %81 : f32 to vector<1x512xf32>
    %83 = arith.mulf %1, %82 : vector<1x512xf32>
    %c27 = arith.constant 27 : index
    %84 = memref.load %arg2[%c27] : memref<37xf32, #tpu.memory_space<smem>>
    %85 = vector.broadcast %84 : f32 to vector<1x512xf32>
    %86 = arith.addf %83, %85 : vector<1x512xf32>
    %c9 = arith.constant 9 : index
    %87 = memref.load %arg2[%c9] : memref<37xf32, #tpu.memory_space<smem>>
    %88 = vector.broadcast %87 : f32 to vector<1x512xf32>
    %89 = arith.mulf %3, %88 : vector<1x512xf32>
    %90 = arith.addf %86, %89 : vector<1x512xf32>
    %c15 = arith.constant 15 : index
    %91 = memref.load %arg2[%c15] : memref<37xf32, #tpu.memory_space<smem>>
    %92 = vector.broadcast %91 : f32 to vector<1x512xf32>
    %93 = arith.mulf %5, %92 : vector<1x512xf32>
    %94 = arith.addf %90, %93 : vector<1x512xf32>
    %c21 = arith.constant 21 : index
    %95 = memref.load %arg2[%c21] : memref<37xf32, #tpu.memory_space<smem>>
    %96 = vector.broadcast %95 : f32 to vector<1x512xf32>
    %97 = arith.mulf %7, %96 : vector<1x512xf32>
    %98 = arith.addf %94, %97 : vector<1x512xf32>
    %99 = math.tanh %98 : vector<1x512xf32>
    %c33 = arith.constant 33 : index
    %100 = memref.load %arg2[%c33] : memref<37xf32, #tpu.memory_space<smem>>
    %101 = vector.broadcast %100 : f32 to vector<1x512xf32>
    %102 = arith.mulf %99, %101 : vector<1x512xf32>
    %103 = arith.addf %80, %102 : vector<1x512xf32>
    %c4 = arith.constant 4 : index
    %104 = memref.load %arg2[%c4] : memref<37xf32, #tpu.memory_space<smem>>
    %105 = vector.broadcast %104 : f32 to vector<1x512xf32>
    %106 = arith.mulf %1, %105 : vector<1x512xf32>
    %c28 = arith.constant 28 : index
    %107 = memref.load %arg2[%c28] : memref<37xf32, #tpu.memory_space<smem>>
    %108 = vector.broadcast %107 : f32 to vector<1x512xf32>
    %109 = arith.addf %106, %108 : vector<1x512xf32>
    %c10 = arith.constant 10 : index
    %110 = memref.load %arg2[%c10] : memref<37xf32, #tpu.memory_space<smem>>
    %111 = vector.broadcast %110 : f32 to vector<1x512xf32>
    %112 = arith.mulf %3, %111 : vector<1x512xf32>
    %113 = arith.addf %109, %112 : vector<1x512xf32>
    %c16 = arith.constant 16 : index
    %114 = memref.load %arg2[%c16] : memref<37xf32, #tpu.memory_space<smem>>
    %115 = vector.broadcast %114 : f32 to vector<1x512xf32>
    %116 = arith.mulf %5, %115 : vector<1x512xf32>
    %117 = arith.addf %113, %116 : vector<1x512xf32>
    %c22 = arith.constant 22 : index
    %118 = memref.load %arg2[%c22] : memref<37xf32, #tpu.memory_space<smem>>
    %119 = vector.broadcast %118 : f32 to vector<1x512xf32>
    %120 = arith.mulf %7, %119 : vector<1x512xf32>
    %121 = arith.addf %117, %120 : vector<1x512xf32>
    %122 = math.tanh %121 : vector<1x512xf32>
    %c34 = arith.constant 34 : index
    %123 = memref.load %arg2[%c34] : memref<37xf32, #tpu.memory_space<smem>>
    %124 = vector.broadcast %123 : f32 to vector<1x512xf32>
    %125 = arith.mulf %122, %124 : vector<1x512xf32>
    %126 = arith.addf %103, %125 : vector<1x512xf32>
    %c5 = arith.constant 5 : index
    %127 = memref.load %arg2[%c5] : memref<37xf32, #tpu.memory_space<smem>>
    %128 = vector.broadcast %127 : f32 to vector<1x512xf32>
    %129 = arith.mulf %1, %128 : vector<1x512xf32>
    %c29 = arith.constant 29 : index
    %130 = memref.load %arg2[%c29] : memref<37xf32, #tpu.memory_space<smem>>
    %131 = vector.broadcast %130 : f32 to vector<1x512xf32>
    %132 = arith.addf %129, %131 : vector<1x512xf32>
    %c11 = arith.constant 11 : index
    %133 = memref.load %arg2[%c11] : memref<37xf32, #tpu.memory_space<smem>>
    %134 = vector.broadcast %133 : f32 to vector<1x512xf32>
    %135 = arith.mulf %3, %134 : vector<1x512xf32>
    %136 = arith.addf %132, %135 : vector<1x512xf32>
    %c17 = arith.constant 17 : index
    %137 = memref.load %arg2[%c17] : memref<37xf32, #tpu.memory_space<smem>>
    %138 = vector.broadcast %137 : f32 to vector<1x512xf32>
    %139 = arith.mulf %5, %138 : vector<1x512xf32>
    %140 = arith.addf %136, %139 : vector<1x512xf32>
    %c23 = arith.constant 23 : index
    %141 = memref.load %arg2[%c23] : memref<37xf32, #tpu.memory_space<smem>>
    %142 = vector.broadcast %141 : f32 to vector<1x512xf32>
    %143 = arith.mulf %7, %142 : vector<1x512xf32>
    %144 = arith.addf %140, %143 : vector<1x512xf32>
    %145 = math.tanh %144 : vector<1x512xf32>
    %c35 = arith.constant 35 : index
    %146 = memref.load %arg2[%c35] : memref<37xf32, #tpu.memory_space<smem>>
    %147 = vector.broadcast %146 : f32 to vector<1x512xf32>
    %148 = arith.mulf %145, %147 : vector<1x512xf32>
    %149 = arith.addf %126, %148 : vector<1x512xf32>
    %150 = math.tanh %149 : vector<1x512xf32>
    %cst_12 = arith.constant 5.000000e-01 : f32
    %151 = vector.broadcast %cst_12 : f32 to vector<1x512xf32>
    %152 = arith.mulf %151, %150 : vector<1x512xf32>
    %cst_13 = arith.constant 5.000000e-01 : f32
    %153 = vector.broadcast %cst_13 : f32 to vector<1x512xf32>
    %154 = arith.addf %152, %153 : vector<1x512xf32>
    %c0_14 = arith.constant 0 : index
    %c0_15 = arith.constant 0 : index
    %155 = vector.load %arg3[%c0_14, %c0_15] : memref<1x512xf32, #tpu.memory_space<vmem>>, vector<1x512xf32>
    tpu.vector_store %arg3[%c0_14, %c0_15], %154 {strides = array<i32>} : memref<1x512xf32, #tpu.memory_space<vmem>>, vector<1x512xf32>,
    return
  }
  func.func @transform_0(%arg0: i32) -> (i32, i32, i32) {
    %c0_i32 = arith.constant 0 : i32
    %c0_i32_0 = arith.constant 0 : i32
    %c0_i32_1 = arith.constant 0 : i32
    return %c0_i32, %arg0, %c0_i32_0 : i32, i32, i32
  }
  func.func @transform_1(%arg0: i32) -> i32 {
    %c0_i32 = arith.constant 0 : i32
    %c0_i32_0 = arith.constant 0 : i32
    return %c0_i32 : i32
  }
  func.func @transform_2(%arg0: i32) -> (i32, i32) {
    %c0_i32 = arith.constant 0 : i32
    %c0_i32_0 = arith.constant 0 : i32
    return %arg0, %c0_i32 : i32, i32
  }
}

</mosaic_0001>

<llo_original>
// kernel: tpu_custom_call.1
$region0: #{tpu_custom_call.1}
  #allocation0 [shape = 'u32[]', space=smem, size = 0x4, offset = 0x4, fixed_abs, tag = 'smem constant byte address 0x4 - core index']
  #allocation1 [shape = 'u32[144,128]{1,0:T(1,128)}', space=vmem, size = 0x12000, scoped, tag = 'internal scratch']
  %s0 = inlined_call_operand.hbm [shape: f32[4,1,512], index: 0, kind: input, shape index: {}]
  %s1 = inlined_call_operand.vmem [shape: f32[37], index: 1, kind: input, shape index: {}]
  %s2 = inlined_call_operand.hbm [shape: f32[1,512], index: 2, kind: output, shape index: {}]
  %s3 = sld [smem:[#allocation0]]
  $region26: #{tpu_custom_call.1} parent=0
    _
  %s5 = ssub.s32 1, %s3
  %s6 = scalar_select 0, %s5, %s3
  $region1: #{tpu_custom_call.1} parent=0
    #allocation2 [shape = 'u8[8192]{0}', space=vmem, size = 0x2000, scoped, tag = 'input window, operand 0, single buffered']
    #allocation3 [shape = 's32[1]{0}', space=sflag, size = 0x4, scoped, tag = 'scoped memory for tpu_custom_call.1']
    #allocation4 [shape = 's32[1]{0}', space=sflag, size = 0x4, scoped, tag = 'scoped memory for tpu_custom_call.1']
    #allocation5 [shape = 's32[1]{0}', space=sflag, size = 0x4, scoped, tag = 'scoped memory for tpu_custom_call.1']
    #allocation6 [shape = 'u8[512]{0}', space=smem, size = 0x200, scoped, tag = 'input window, operand 1, single buffered']
    #allocation7 [shape = 'u8[2048]{0}', space=vmem, size = 0x800, scoped, tag = 'output window, operand 0, single buffered']
    %7 = vsyncpa [#allocation3], 0
    %8 = vsyncpa [#allocation5], 0
    %9 = vsyncpa [#allocation4], 0
    // Predicated region
    $region2: #{tpu_custom_call.1} parent=1 // pred_check
      _
    $region3: #{tpu_custom_call.1} parent=1 // pred_check_branch
      %11 = sbr.rel (0) target = $region5
    $region4: #{tpu_custom_call.1} parent=1 // pred_region
      %s13 = ssub.s32 256, 256
      %14 = vsyncadd [#allocation3], %s13
      %s15 = sshll.u32 [#allocation2], 4
      %s16 = int_to_ptr.vmem [resolvable:$true] %s15
      %21 = dma.hbm_to_vmem [thread:$0]  %s0, 256, %s16, [#allocation3], 64, 64, 4
    $region5: #{tpu_custom_call.1} parent=1 // pred_fallthru
      _
    // Predicated region
    $region6: #{tpu_custom_call.1} parent=1 // pred_check
      _
    $region7: #{tpu_custom_call.1} parent=1 // pred_check_branch
      %23 = sbr.rel (0) target = $region9
    $region8: #{tpu_custom_call.1} parent=1 // pred_region
      %s25 = ssub.s32 16, 16
      %26 = vsyncadd [#allocation5], %s25
      %s28 = sshll.u32 %s1, 4
      %s29 = int_to_ptr.vmem [resolvable:$true] %s28
      %31 = dma.vmem_to_smem %s29, 16, [#allocation6], [#allocation5]
    $region9: #{tpu_custom_call.1} parent=1 // pred_fallthru
      _
    // Predicated region
    $region10: #{tpu_custom_call.1} parent=1 // pred_check
      _
    $region11: #{tpu_custom_call.1} parent=1 // pred_check_branch
      %33 = sbr.rel (0) target = $region13
    $region12: #{tpu_custom_call.1} parent=1 // pred_region
      %34 = dma.done [#allocation3], 256
    $region13: #{tpu_custom_call.1} parent=1 // pred_fallthru
      _
    // Predicated region
    $region14: #{tpu_custom_call.1} parent=1 // pred_check
      _
    $region15: #{tpu_custom_call.1} parent=1 // pred_check_branch
      %36 = sbr.rel (0) target = $region17
    $region16: #{tpu_custom_call.1} parent=1 // pred_region
      %37 = dma.done [#allocation5], 16
    $region17: #{tpu_custom_call.1} parent=1 // pred_fallthru
      _
    %38 = sfence
    %v39 = vld [vmem:[#allocation2] sm:$0xf]
    %s40 = scalar_lea.vmem [#allocation2], 4
    %v41 = vld [vmem:[%s40] sm:$0xf]
    %s42 = scalar_lea.vmem [#allocation2], 8
    %v43 = vld [vmem:[%s42] sm:$0xf]
    %s44 = scalar_lea.vmem [#allocation2], 12
    %v45 = vld [vmem:[%s44] sm:$0xf]
    %s46 = sld [smem:[#allocation6 + $0x24]]
    %v47 = vstv %s46
    %v48 = vadd.f32 %v47, 0.0
    %s49 = sld [smem:[#allocation6]]
    %v50 = vstv %s49
    %v51 = vmul.f32 %v39, %v50
    %s52 = sld [smem:[#allocation6 + $0x18]]
    %v53 = vstv %s52
    %v54 = vadd.f32 %v51, %v53
    %s55 = sld [smem:[#allocation6 + $0x6]]
    %v56 = vstv %s55
    %v57 = vmul.f32 %v41, %v56
    %v58 = vadd.f32 %v54, %v57
    %s59 = sld [smem:[#allocation6 + $0xc]]
    %v60 = vstv %s59
    %v61 = vmul.f32 %v43, %v60
    %v62 = vadd.f32 %v58, %v61
    %s63 = sld [smem:[#allocation6 + $0x12]]
    %v64 = vstv %s63
    %v65 = vmul.f32 %v45, %v64
    %v66 = vadd.f32 %v62, %v65
    %v67 = vtanh.pop %v66
    %s68 = sld [smem:[#allocation6 + $0x1e]]
    %v69 = vstv %s68
    %v70 = vmul.f32 %v67, %v69
    %v71 = vadd.f32 %v48, %v70
    %s72 = sld [smem:[#allocation6 + $0x1]]
    %v73 = vstv %s72
    %v74 = vmul.f32 %v39, %v73
    %s75 = sld [smem:[#allocation6 + $0x19]]
    %v76 = vstv %s75
    %v77 = vadd.f32 %v74, %v76
    %s78 = sld [smem:[#allocation6 + $0x7]]
    %v79 = vstv %s78
    %v80 = vmul.f32 %v41, %v79
    %v81 = vadd.f32 %v77, %v80
    %s82 = sld [smem:[#allocation6 + $0xd]]
    %v83 = vstv %s82
    %v84 = vmul.f32 %v43, %v83
    %v85 = vadd.f32 %v81, %v84
    %s86 = sld [smem:[#allocation6 + $0x13]]
    %v87 = vstv %s86
    %v88 = vmul.f32 %v45, %v87
    %v89 = vadd.f32 %v85, %v88
    %v90 = vtanh.pop %v89
    %s91 = sld [smem:[#allocation6 + $0x1f]]
    %v92 = vstv %s91
    %v93 = vmul.f32 %v90, %v92
    %v94 = vadd.f32 %v71, %v93
    %s95 = sld [smem:[#allocation6 + $0x2]]
    %v96 = vstv %s95
    %v97 = vmul.f32 %v39, %v96
    %s98 = sld [smem:[#allocation6 + $0x1a]]
    %v99 = vstv %s98
    %v100 = vadd.f32 %v97, %v99
    %s101 = sld [smem:[#allocation6 + $0x8]]
    %v102 = vstv %s101
    %v103 = vmul.f32 %v41, %v102
    %v104 = vadd.f32 %v100, %v103
    %s105 = sld [smem:[#allocation6 + $0xe]]
    %v106 = vstv %s105
    %v107 = vmul.f32 %v43, %v106
    %v108 = vadd.f32 %v104, %v107
    %s109 = sld [smem:[#allocation6 + $0x14]]
    %v110 = vstv %s109
    %v111 = vmul.f32 %v45, %v110
    %v112 = vadd.f32 %v108, %v111
    %v113 = vtanh.pop %v112
    %s114 = sld [smem:[#allocation6 + $0x20]]
    %v115 = vstv %s114
    %v116 = vmul.f32 %v113, %v115
    %v117 = vadd.f32 %v94, %v116
    %s118 = sld [smem:[#allocation6 + $0x3]]
    %v119 = vstv %s118
    %v120 = vmul.f32 %v39, %v119
    %s121 = sld [smem:[#allocation6 + $0x1b]]
    %v122 = vstv %s121
    %v123 = vadd.f32 %v120, %v122
    %s124 = sld [smem:[#allocation6 + $0x9]]
    %v125 = vstv %s124
    %v126 = vmul.f32 %v41, %v125
    %v127 = vadd.f32 %v123, %v126
    %s128 = sld [smem:[#allocation6 + $0xf]]
    %v129 = vstv %s128
    %v130 = vmul.f32 %v43, %v129
    %v131 = vadd.f32 %v127, %v130
    %s132 = sld [smem:[#allocation6 + $0x15]]
    %v133 = vstv %s132
    %v134 = vmul.f32 %v45, %v133
    %v135 = vadd.f32 %v131, %v134
    %v136 = vtanh.pop %v135
    %s137 = sld [smem:[#allocation6 + $0x21]]
    %v138 = vstv %s137
    %v139 = vmul.f32 %v136, %v138
    %v140 = vadd.f32 %v117, %v139
    %s141 = sld [smem:[#allocation6 + $0x4]]
    %v142 = vstv %s141
    %v143 = vmul.f32 %v39, %v142
    %s144 = sld [smem:[#allocation6 + $0x1c]]
    %v145 = vstv %s144
    %v146 = vadd.f32 %v143, %v145
    %s147 = sld [smem:[#allocation6 + $0xa]]
    %v148 = vstv %s147
    %v149 = vmul.f32 %v41, %v148
    %v150 = vadd.f32 %v146, %v149
    %s151 = sld [smem:[#allocation6 + $0x10]]
    %v152 = vstv %s151
    %v153 = vmul.f32 %v43, %v152
    %v154 = vadd.f32 %v150, %v153
    %s155 = sld [smem:[#allocation6 + $0x16]]
    %v156 = vstv %s155
    %v157 = vmul.f32 %v45, %v156
    %v158 = vadd.f32 %v154, %v157
    %v159 = vtanh.pop %v158
    %s160 = sld [smem:[#allocation6 + $0x22]]
    %v161 = vstv %s160
    %v162 = vmul.f32 %v159, %v161
    %v163 = vadd.f32 %v140, %v162
    %s164 = sld [smem:[#allocation6 + $0x5]]
    %v165 = vstv %s164
    %v166 = vmul.f32 %v39, %v165
    %s167 = sld [smem:[#allocation6 + $0x1d]]
    %v168 = vstv %s167
    %v169 = vadd.f32 %v166, %v168
    %s170 = sld [smem:[#allocation6 + $0xb]]
    %v171 = vstv %s170
    %v172 = vmul.f32 %v41, %v171
    %v173 = vadd.f32 %v169, %v172
    %s174 = sld [smem:[#allocation6 + $0x11]]
    %v175 = vstv %s174
    %v176 = vmul.f32 %v43, %v175
    %v177 = vadd.f32 %v173, %v176
    %s178 = sld [smem:[#allocation6 + $0x17]]
    %v179 = vstv %s178
    %v180 = vmul.f32 %v45, %v179
    %v181 = vadd.f32 %v177, %v180
    %v182 = vtanh.pop %v181
    %s183 = sld [smem:[#allocation6 + $0x23]]
    %v184 = vstv %s183
    %v185 = vmul.f32 %v182, %v184
    %v186 = vadd.f32 %v163, %v185
    %v187 = vtanh.pop %v186
    %v188 = vmul.f32 %v187, 0.5
    %v189 = vadd.f32 %v188, 0.5
    %v190 = vlaneseq
    %vm191 = vcmp.ge.s32.totalorder %v190, 0
    %vm192 = vcmp.lt.s32.totalorder %v190, 512
    %vm193 = vmand %vm191, %vm192
    %194 = vst.msk [vmem:[#allocation7] sm:$0xf] %vm193, %v189
    // Predicated region
    $region18: #{tpu_custom_call.1} parent=1 // pred_check
      _
    $region19: #{tpu_custom_call.1} parent=1 // pred_check_branch
      %196 = sbr.rel (0) target = $region21
    $region20: #{tpu_custom_call.1} parent=1 // pred_region
      %s198 = ssub.s32 64, 64
      %199 = vsyncadd [#allocation4], %s198
      %s201 = sshll.u32 [#allocation7], 4
      %s202 = int_to_ptr.vmem [resolvable:$true] %s201
      %204 = dma.vmem_to_hbm [thread:$0]  %s202, 64, %s2, [#allocation4]
    $region21: #{tpu_custom_call.1} parent=1 // pred_fallthru
      _
    // Predicated region
    $region22: #{tpu_custom_call.1} parent=1 // pred_check
      _
    $region23: #{tpu_custom_call.1} parent=1 // pred_check_branch
      %206 = sbr.rel (0) target = $region25
    $region24: #{tpu_custom_call.1} parent=1 // pred_region
      %207 = dma.done [#allocation4], 64
    $region25: #{tpu_custom_call.1} parent=1 // pred_fallthru
      _
    %208 = vsyncpa [#allocation3], 1
    %209 = vsyncpa [#allocation4], 1
    %210 = vsyncpa [#allocation5], 1

</llo_original>
